<compile_context>
chip_gen: v7x
topology: tpu7x:2x2x1
jax: 0.10.0
libtpu: 0.0.40
codegen_flags: <defaults>
</compile_context>

<pallas_src>
import jax
import jax.numpy as jnp
from jax.experimental import pallas as pl
from jax.experimental.pallas import tpu as pltpu

# ---------------------------------------------------------------------------
# Static configuration (small shapes, consistent with the module defaults)
# ---------------------------------------------------------------------------
GENOME_DIM   = 128                 # MetaLearner default genome_dim
EMB_DIM      = 16                  # per-layer embedding fed to the hypernet
HYPER_HIDDEN = 64                  # hypernet hidden width
LAYER_DIMS   = [16, 32, 8]         # target MLP: 16 -> 32 -> 8
BATCH        = 2

_PAIRS     = list(zip(LAYER_DIMS[:-1], LAYER_DIMS[1:]))
NUM_LAYERS = len(_PAIRS)
MAX_FLAT   = max(di * do + do for di, do in _PAIRS)   # 544 (hypernet flat width)
MAX_DIN    = max(di for di, _ in _PAIRS)              # 32
MAX_DOUT   = max(do for _, do in _PAIRS)              # 32

_HIGHEST = jax.lax.Precision.HIGHEST


def _full_spec(shape):
    """Whole-array block (single grid step), everything resident in VMEM."""
    nd = len(shape)
    return pl.BlockSpec(shape, lambda i: (0,) * nd)


# ---------------------------------------------------------------------------
# Fused kernel: UniversalHyperNet + TargetMLP_Generic forward in one shot.
# ---------------------------------------------------------------------------
def _metalearner_kernel(x_ref, emb_ref, w1e_ref, w2_ref, b2_ref, out_ref, w_s):
    # ---- hypernet layer 1, all target layers at once -----------------------
    # The z path (z @ w1z + b1) is folded host-side into the last row of
    # w1e_aug (matched by the ones column appended to emb_aug), so a single
    # small f32 MXU dot produces the per-layer hidden codes h_all (L, H).
    h_all = jnp.maximum(
        jnp.dot(emb_ref[...], w1e_ref[...], preferred_element_type=jnp.float32),
        0.0)                                                            # (L, H)

    # ---- hypernet layer 2: one bf16 MXU matmul for every layer -------------
    flat_all = jnp.dot(h_all.astype(jnp.bfloat16), w2_ref[...],
                       preferred_element_type=jnp.float32) + b2_ref[...]  # (L, MAX_FLAT) f32

    # ---- target MLP, one generated layer at a time --------------------------
    act = x_ref[...]                                                    # (B, d0)
    for l, (din, dout) in enumerate(_PAIRS):                            # static unroll
        flat_l = flat_all[l:l + 1, :]                                   # (1, MAX_FLAT)
        # Unpack the generated W_l rows into a small VMEM scratch with static
        # lane slices (no reshape), then run the target layer on the MXU.
        for i in range(din):
            w_s[i:i + 1, 0:dout] = flat_l[:, i * dout:(i + 1) * dout]
        b_l = flat_l[:, din * dout:din * dout + dout]                   # (1, dout)
        act = jnp.dot(act, w_s[0:din, 0:dout],
                      preferred_element_type=jnp.float32) + b_l
        if l < NUM_LAYERS - 1:
            act = jnp.maximum(act, 0.0)
    out_ref[...] = act


def meta_learner_forward(x, packed):
    """MetaLearner.forward: z = self.z.expand(B, -1); return target(x, z)."""
    B = x.shape[0]
    ins = (x, packed["emb_aug"], packed["w1e_aug"], packed["w2"], packed["b2"])
    return pl.pallas_call(
        _metalearner_kernel,
        grid=(1,),
        in_specs=[_full_spec(a.shape) for a in ins],
        out_specs=_full_spec((B, LAYER_DIMS[-1])),
        out_shape=jax.ShapeDtypeStruct((B, LAYER_DIMS[-1]), jnp.float32),
        scratch_shapes=[pltpu.VMEM((MAX_DIN, MAX_DOUT), jnp.float32)],
        compiler_params=pltpu.CompilerParams(dimension_semantics=("arbitrary",)),
    )(*ins)


# ---------------------------------------------------------------------------
# Parameters: canonical layout + one-time packing for the fused kernel.
# ---------------------------------------------------------------------------
def init_params(key):
    ks = jax.random.split(key, 5)

    def rnd(k, shape, scale=1.0):
        return scale * jax.random.normal(k, shape, dtype=jnp.float32)

    return {
        "z":   rnd(ks[0], (1, GENOME_DIM)),                       # nn.Parameter(randn(1, G))
        "emb": rnd(ks[1], (NUM_LAYERS, EMB_DIM)),
        "w1z": rnd(ks[2], (GENOME_DIM, HYPER_HIDDEN), 1.0 / float(GENOME_DIM) ** 0.5),
        "w1e": rnd(ks[3], (EMB_DIM, HYPER_HIDDEN), 1.0 / float(EMB_DIM) ** 0.5),
        "b1":  jnp.zeros((1, HYPER_HIDDEN), jnp.float32),
        "w2":  rnd(ks[4], (HYPER_HIDDEN, MAX_FLAT), 1.0 / float(HYPER_HIDDEN) ** 0.5),
        "b2":  jnp.zeros((1, MAX_FLAT), jnp.float32),
    }


def pack_params(params):
    """One-time re-layout for the fused kernel (re-run after any param update).

    * h0 = z @ w1z + b1 is folded into an extra row of w1e (the per-sample z is
      identical, so the hypernet hidden code depends only on the layer emb).
    * emb gets a matching ones column so emb_aug @ w1e_aug == emb@w1e + h0.
    * w2 (the dominant array) is stored in bf16; it only feeds the MXU.
    """
    h0 = jnp.dot(params["z"], params["w1z"], precision=_HIGHEST) + params["b1"]  # (1, H)
    emb_aug = jnp.concatenate(
        [params["emb"], jnp.ones((NUM_LAYERS, 1), jnp.float32)], axis=1)         # (L, E+1) f32
    w1e_aug = jnp.concatenate([params["w1e"], h0], axis=0)                        # (E+1, H) f32
    return {
        "emb_aug": emb_aug,
        "w1e_aug": w1e_aug,
        "w2": params["w2"].astype(jnp.bfloat16),                                  # (H, MAX_FLAT) bf16
        "b2": params["b2"],                                                        # (1, MAX_FLAT) f32
    }


# ---------------------------------------------------------------------------
# Pure-JAX references (for correctness check).
# ---------------------------------------------------------------------------
def reference_forward_packed(x, packed):
    """Exactly mirrors the kernel math (same packed bf16 w2, same cast points)."""
    h_all = jax.nn.relu(jnp.dot(packed["emb_aug"], packed["w1e_aug"],
                                precision=_HIGHEST,
                                preferred_element_type=jnp.float32))              # (L, H)
    flat = jnp.dot(h_all.astype(jnp.bfloat16), packed["w2"],
                   preferred_element_type=jnp.float32) + packed["b2"]             # (L, MAX_FLAT)
    act = x
    for l, (din, dout) in enumerate(_PAIRS):
        W = flat[l, :din * dout].reshape(din, dout)
        b = flat[l, din * dout:din * dout + dout][None, :]
        act = jnp.dot(act, W, precision=_HIGHEST,
                      preferred_element_type=jnp.float32) + b
        if l < NUM_LAYERS - 1:
            act = jax.nn.relu(act)
    return act


def reference_forward(x, params):
    """Canonical full-f32 reference of the assumed module forward."""
    B = x.shape[0]
    z = jnp.broadcast_to(params["z"], (B, GENOME_DIM))
    act = x
    for l, (din, dout) in enumerate(_PAIRS):
        e = params["emb"][l:l + 1]
        h = jax.nn.relu(jnp.dot(z, params["w1z"], precision=_HIGHEST)
                        + jnp.dot(e, params["w1e"], precision=_HIGHEST)
                        + params["b1"])
        flat = jnp.dot(h, params["w2"], precision=_HIGHEST) + params["b2"]
        W = flat[:, :din * dout].reshape(B, din, dout)
        b = flat[:, din * dout:din * dout + dout]
        act = jnp.einsum("bi,bio->bo", act, W, precision=_HIGHEST) + b
        if l < NUM_LAYERS - 1:
            act = jax.nn.relu(act)
    return act


if __name__ == "__main__":
    key = jax.random.PRNGKey(0)
    pkey, xkey = jax.random.split(key)
    params = init_params(pkey)
    packed = pack_params(params)                       # one-time re-layout
    x = jax.random.normal(xkey, (BATCH, LAYER_DIMS[0]), dtype=jnp.float32)

    out = jax.block_until_ready(meta_learner_forward(x, packed))
    assert out.shape == (BATCH, LAYER_DIMS[-1]), out.shape

    # Exact-math mirror of the kernel (same bf16 packing): tight tolerance.
    ref_exact = reference_forward_packed(x, packed)
    assert jnp.allclose(out, ref_exact, atol=5e-2, rtol=1e-2), \
        "mismatch vs packed (bf16-mirroring) JAX reference"

    # Canonical full-f32 reference: loose tolerance for bf16 w2 quantization.
    ref_f32 = reference_forward(x, params)
    assert jnp.allclose(out, ref_f32, atol=1.0, rtol=5e-2), \
        "mismatch vs canonical f32 JAX reference"

    print("KERNEL_OK")
</pallas_src>

<mosaic_0001>
module attributes {stable_mosaic.version = 11 : i64} {
  func.func @_metalearner_kernel(%arg0: i32, %arg1: memref<2x16xf32, #tpu.memory_space<vmem>>, %arg2: memref<2x17xf32, #tpu.memory_space<vmem>>, %arg3: memref<17x64xf32, #tpu.memory_space<vmem>>, %arg4: memref<64x544xbf16, #tpu.memory_space<vmem>>, %arg5: memref<1x544xf32, #tpu.memory_space<vmem>>, %arg6: memref<2x8xf32, #tpu.memory_space<vmem>>, %arg7: memref<32x32xf32, #tpu.memory_space<vmem>>) attributes {dimension_semantics = [#tpu.dimension_semantics<arbitrary>], iteration_bounds = array<i64: 1>, scalar_prefetch = 0 : i64, scratch_operands = 1 : i64, tpu.core_type = #tpu.core_type<tc>, window_params = [{pipeline_mode = #tpu.pipeline_mode<synchronous>, transform_indices = @transform_0, window_bounds = array<i64: 2, 16>}, {pipeline_mode = #tpu.pipeline_mode<synchronous>, transform_indices = @transform_1, window_bounds = array<i64: 2, 17>}, {pipeline_mode = #tpu.pipeline_mode<synchronous>, transform_indices = @transform_2, window_bounds = array<i64: 17, 64>}, {pipeline_mode = #tpu.pipeline_mode<synchronous>, transform_indices = @transform_3, window_bounds = array<i64: 64, 544>}, {pipeline_mode = #tpu.pipeline_mode<synchronous>, transform_indices = @transform_4, window_bounds = array<i64: 1, 544>}, {pipeline_mode = #tpu.pipeline_mode<synchronous>, transform_indices = @transform_5, window_bounds = array<i64: 2, 8>}]} {
    %c0 = arith.constant 0 : index
    %c0_0 = arith.constant 0 : index
    %0 = vector.load %arg2[%c0, %c0_0] : memref<2x17xf32, #tpu.memory_space<vmem>>, vector<2x17xf32>
    %c0_1 = arith.constant 0 : index
    %c0_2 = arith.constant 0 : index
    %1 = vector.load %arg3[%c0_1, %c0_2] : memref<17x64xf32, #tpu.memory_space<vmem>>, vector<17x64xf32>
    %cst = arith.constant dense<0.000000e+00> : vector<2x64xf32>
    %2 = tpu.matmul %0, %1, %cst {dimension_numbers = #tpu.dot_dimension_numbers<[1], [0], [0], [1], [0, 0, 1, 1], [], []>} : vector<2x17xf32>, vector<17x64xf32>, vector<2x64xf32> -> vector<2x64xf32>
    %cst_3 = arith.constant 0.000000e+00 : f32
    %3 = vector.broadcast %cst_3 : f32 to vector<2x64xf32>
    %4 = arith.maximumf %2, %3 : vector<2x64xf32>
    %5 = arith.truncf %4 : vector<2x64xf32> to vector<2x64xbf16>
    %c0_4 = arith.constant 0 : index
    %c0_5 = arith.constant 0 : index
    %6 = vector.load %arg4[%c0_4, %c0_5] : memref<64x544xbf16, #tpu.memory_space<vmem>>, vector<64x544xbf16>
    %cst_6 = arith.constant dense<0.000000e+00> : vector<2x544xf32>
    %7 = tpu.matmul %5, %6, %cst_6 {dimension_numbers = #tpu.dot_dimension_numbers<[1], [0], [0], [1], [0, 0, 1, 1], [], []>} : vector<2x64xbf16>, vector<64x544xbf16>, vector<2x544xf32> -> vector<2x544xf32>
    %c0_7 = arith.constant 0 : index
    %c0_8 = arith.constant 0 : index
    %8 = vector.load %arg5[%c0_7, %c0_8] : memref<1x544xf32, #tpu.memory_space<vmem>>, vector<1x544xf32>
    %9 = vector.broadcast %8 : vector<1x544xf32> to vector<2x544xf32>
    %10 = arith.addf %7, %9 : vector<2x544xf32>
    %c0_9 = arith.constant 0 : index
    %c0_10 = arith.constant 0 : index
    %11 = vector.load %arg1[%c0_9, %c0_10] : memref<2x16xf32, #tpu.memory_space<vmem>>, vector<2x16xf32>
    %12 = vector.extract_strided_slice %10 {offsets = [0, 0], sizes = [1, 544], strides = [1, 1]} : vector<2x544xf32> to vector<1x544xf32>
    %13 = vector.extract_strided_slice %12 {offsets = [0, 0], sizes = [1, 32], strides = [1, 1]} : vector<1x544xf32> to vector<1x32xf32>
    %c0_11 = arith.constant 0 : index
    %c0_12 = arith.constant 0 : index
    %14 = vector.load %arg7[%c0_11, %c0_12] : memref<32x32xf32, #tpu.memory_space<vmem>>, vector<1x32xf32>
    tpu.vector_store %arg7[%c0_11, %c0_12], %13 {strides = array<i32>} : memref<32x32xf32, #tpu.memory_space<vmem>>, vector<1x32xf32>,
    %15 = vector.extract_strided_slice %12 {offsets = [0, 32], sizes = [1, 32], strides = [1, 1]} : vector<1x544xf32> to vector<1x32xf32>
    %c1 = arith.constant 1 : index
    %c0_13 = arith.constant 0 : index
    %16 = vector.load %arg7[%c1, %c0_13] : memref<32x32xf32, #tpu.memory_space<vmem>>, vector<1x32xf32>
    tpu.vector_store %arg7[%c1, %c0_13], %15 {strides = array<i32>} : memref<32x32xf32, #tpu.memory_space<vmem>>, vector<1x32xf32>,
    %17 = vector.extract_strided_slice %12 {offsets = [0, 64], sizes = [1, 32], strides = [1, 1]} : vector<1x544xf32> to vector<1x32xf32>
    %c2 = arith.constant 2 : index
    %c0_14 = arith.constant 0 : index
    %18 = vector.load %arg7[%c2, %c0_14] : memref<32x32xf32, #tpu.memory_space<vmem>>, vector<1x32xf32>
    tpu.vector_store %arg7[%c2, %c0_14], %17 {strides = array<i32>} : memref<32x32xf32, #tpu.memory_space<vmem>>, vector<1x32xf32>,
    %19 = vector.extract_strided_slice %12 {offsets = [0, 96], sizes = [1, 32], strides = [1, 1]} : vector<1x544xf32> to vector<1x32xf32>
    %c3 = arith.constant 3 : index
    %c0_15 = arith.constant 0 : index
    %20 = vector.load %arg7[%c3, %c0_15] : memref<32x32xf32, #tpu.memory_space<vmem>>, vector<1x32xf32>
    tpu.vector_store %arg7[%c3, %c0_15], %19 {strides = array<i32>} : memref<32x32xf32, #tpu.memory_space<vmem>>, vector<1x32xf32>,
    %21 = vector.extract_strided_slice %12 {offsets = [0, 128], sizes = [1, 32], strides = [1, 1]} : vector<1x544xf32> to vector<1x32xf32>
    %c4 = arith.constant 4 : index
    %c0_16 = arith.constant 0 : index
    %22 = vector.load %arg7[%c4, %c0_16] : memref<32x32xf32, #tpu.memory_space<vmem>>, vector<1x32xf32>
    tpu.vector_store %arg7[%c4, %c0_16], %21 {strides = array<i32>} : memref<32x32xf32, #tpu.memory_space<vmem>>, vector<1x32xf32>,
    %23 = vector.extract_strided_slice %12 {offsets = [0, 160], sizes = [1, 32], strides = [1, 1]} : vector<1x544xf32> to vector<1x32xf32>
    %c5 = arith.constant 5 : index
    %c0_17 = arith.constant 0 : index
    %24 = vector.load %arg7[%c5, %c0_17] : memref<32x32xf32, #tpu.memory_space<vmem>>, vector<1x32xf32>
    tpu.vector_store %arg7[%c5, %c0_17], %23 {strides = array<i32>} : memref<32x32xf32, #tpu.memory_space<vmem>>, vector<1x32xf32>,
    %25 = vector.extract_strided_slice %12 {offsets = [0, 192], sizes = [1, 32], strides = [1, 1]} : vector<1x544xf32> to vector<1x32xf32>
    %c6 = arith.constant 6 : index
    %c0_18 = arith.constant 0 : index
    %26 = vector.load %arg7[%c6, %c0_18] : memref<32x32xf32, #tpu.memory_space<vmem>>, vector<1x32xf32>
    tpu.vector_store %arg7[%c6, %c0_18], %25 {strides = array<i32>} : memref<32x32xf32, #tpu.memory_space<vmem>>, vector<1x32xf32>,
    %27 = vector.extract_strided_slice %12 {offsets = [0, 224], sizes = [1, 32], strides = [1, 1]} : vector<1x544xf32> to vector<1x32xf32>
    %c7 = arith.constant 7 : index
    %c0_19 = arith.constant 0 : index
    %28 = vector.load %arg7[%c7, %c0_19] : memref<32x32xf32, #tpu.memory_space<vmem>>, vector<1x32xf32>
    tpu.vector_store %arg7[%c7, %c0_19], %27 {strides = array<i32>} : memref<32x32xf32, #tpu.memory_space<vmem>>, vector<1x32xf32>,
    %29 = vector.extract_strided_slice %12 {offsets = [0, 256], sizes = [1, 32], strides = [1, 1]} : vector<1x544xf32> to vector<1x32xf32>
    %c8 = arith.constant 8 : index
    %c0_20 = arith.constant 0 : index
    %30 = vector.load %arg7[%c8, %c0_20] : memref<32x32xf32, #tpu.memory_space<vmem>>, vector<1x32xf32>
    tpu.vector_store %arg7[%c8, %c0_20], %29 {strides = array<i32>} : memref<32x32xf32, #tpu.memory_space<vmem>>, vector<1x32xf32>,
    %31 = vector.extract_strided_slice %12 {offsets = [0, 288], sizes = [1, 32], strides = [1, 1]} : vector<1x544xf32> to vector<1x32xf32>
    %c9 = arith.constant 9 : index
    %c0_21 = arith.constant 0 : index
    %32 = vector.load %arg7[%c9, %c0_21] : memref<32x32xf32, #tpu.memory_space<vmem>>, vector<1x32xf32>
    tpu.vector_store %arg7[%c9, %c0_21], %31 {strides = array<i32>} : memref<32x32xf32, #tpu.memory_space<vmem>>, vector<1x32xf32>,
    %33 = vector.extract_strided_slice %12 {offsets = [0, 320], sizes = [1, 32], strides = [1, 1]} : vector<1x544xf32> to vector<1x32xf32>
    %c10 = arith.constant 10 : index
    %c0_22 = arith.constant 0 : index
    %34 = vector.load %arg7[%c10, %c0_22] : memref<32x32xf32, #tpu.memory_space<vmem>>, vector<1x32xf32>
    tpu.vector_store %arg7[%c10, %c0_22], %33 {strides = array<i32>} : memref<32x32xf32, #tpu.memory_space<vmem>>, vector<1x32xf32>,
    %35 = vector.extract_strided_slice %12 {offsets = [0, 352], sizes = [1, 32], strides = [1, 1]} : vector<1x544xf32> to vector<1x32xf32>
    %c11 = arith.constant 11 : index
    %c0_23 = arith.constant 0 : index
    %36 = vector.load %arg7[%c11, %c0_23] : memref<32x32xf32, #tpu.memory_space<vmem>>, vector<1x32xf32>
    tpu.vector_store %arg7[%c11, %c0_23], %35 {strides = array<i32>} : memref<32x32xf32, #tpu.memory_space<vmem>>, vector<1x32xf32>,
    %37 = vector.extract_strided_slice %12 {offsets = [0, 384], sizes = [1, 32], strides = [1, 1]} : vector<1x544xf32> to vector<1x32xf32>
    %c12 = arith.constant 12 : index
    %c0_24 = arith.constant 0 : index
    %38 = vector.load %arg7[%c12, %c0_24] : memref<32x32xf32, #tpu.memory_space<vmem>>, vector<1x32xf32>
    tpu.vector_store %arg7[%c12, %c0_24], %37 {strides = array<i32>} : memref<32x32xf32, #tpu.memory_space<vmem>>, vector<1x32xf32>,
    %39 = vector.extract_strided_slice %12 {offsets = [0, 416], sizes = [1, 32], strides = [1, 1]} : vector<1x544xf32> to vector<1x32xf32>
    %c13 = arith.constant 13 : index
    %c0_25 = arith.constant 0 : index
    %40 = vector.load %arg7[%c13, %c0_25] : memref<32x32xf32, #tpu.memory_space<vmem>>, vector<1x32xf32>
    tpu.vector_store %arg7[%c13, %c0_25], %39 {strides = array<i32>} : memref<32x32xf32, #tpu.memory_space<vmem>>, vector<1x32xf32>,
    %41 = vector.extract_strided_slice %12 {offsets = [0, 448], sizes = [1, 32], strides = [1, 1]} : vector<1x544xf32> to vector<1x32xf32>
    %c14 = arith.constant 14 : index
    %c0_26 = arith.constant 0 : index
    %42 = vector.load %arg7[%c14, %c0_26] : memref<32x32xf32, #tpu.memory_space<vmem>>, vector<1x32xf32>
    tpu.vector_store %arg7[%c14, %c0_26], %41 {strides = array<i32>} : memref<32x32xf32, #tpu.memory_space<vmem>>, vector<1x32xf32>,
    %43 = vector.extract_strided_slice %12 {offsets = [0, 480], sizes = [1, 32], strides = [1, 1]} : vector<1x544xf32> to vector<1x32xf32>
    %c15 = arith.constant 15 : index
    %c0_27 = arith.constant 0 : index
    %44 = vector.load %arg7[%c15, %c0_27] : memref<32x32xf32, #tpu.memory_space<vmem>>, vector<1x32xf32>
    tpu.vector_store %arg7[%c15, %c0_27], %43 {strides = array<i32>} : memref<32x32xf32, #tpu.memory_space<vmem>>, vector<1x32xf32>,
    %45 = vector.extract_strided_slice %12 {offsets = [0, 512], sizes = [1, 32], strides = [1, 1]} : vector<1x544xf32> to vector<1x32xf32>
    %c0_28 = arith.constant 0 : index
    %c0_29 = arith.constant 0 : index
    %46 = vector.load %arg7[%c0_28, %c0_29] : memref<32x32xf32, #tpu.memory_space<vmem>>, vector<16x32xf32>
    %cst_30 = arith.constant dense<0.000000e+00> : vector<2x32xf32>
    %47 = tpu.matmul %11, %46, %cst_30 {dimension_numbers = #tpu.dot_dimension_numbers<[1], [0], [0], [1], [0, 0, 1, 1], [], []>} : vector<2x16xf32>, vector<16x32xf32>, vector<2x32xf32> -> vector<2x32xf32>
    %48 = vector.broadcast %45 : vector<1x32xf32> to vector<2x32xf32>
    %49 = arith.addf %47, %48 : vector<2x32xf32>
    %cst_31 = arith.constant 0.000000e+00 : f32
    %50 = vector.broadcast %cst_31 : f32 to vector<2x32xf32>
    %51 = arith.maximumf %49, %50 : vector<2x32xf32>
    %52 = vector.extract_strided_slice %10 {offsets = [1, 0], sizes = [1, 544], strides = [1, 1]} : vector<2x544xf32> to vector<1x544xf32>
    %53 = vector.extract_strided_slice %52 {offsets = [0, 0], sizes = [1, 8], strides = [1, 1]} : vector<1x544xf32> to vector<1x8xf32>
    %c0_32 = arith.constant 0 : index
    %c0_33 = arith.constant 0 : index
    %54 = vector.load %arg7[%c0_32, %c0_33] : memref<32x32xf32, #tpu.memory_space<vmem>>, vector<1x8xf32>
    tpu.vector_store %arg7[%c0_32, %c0_33], %53 {strides = array<i32>} : memref<32x32xf32, #tpu.memory_space<vmem>>, vector<1x8xf32>,
    %55 = vector.extract_strided_slice %52 {offsets = [0, 8], sizes = [1, 8], strides = [1, 1]} : vector<1x544xf32> to vector<1x8xf32>
    %c1_34 = arith.constant 1 : index
    %c0_35 = arith.constant 0 : index
    %56 = vector.load %arg7[%c1_34, %c0_35] : memref<32x32xf32, #tpu.memory_space<vmem>>, vector<1x8xf32>
    tpu.vector_store %arg7[%c1_34, %c0_35], %55 {strides = array<i32>} : memref<32x32xf32, #tpu.memory_space<vmem>>, vector<1x8xf32>,
    %57 = vector.extract_strided_slice %52 {offsets = [0, 16], sizes = [1, 8], strides = [1, 1]} : vector<1x544xf32> to vector<1x8xf32>
    %c2_36 = arith.constant 2 : index
    %c0_37 = arith.constant 0 : index
    %58 = vector.load %arg7[%c2_36, %c0_37] : memref<32x32xf32, #tpu.memory_space<vmem>>, vector<1x8xf32>
    tpu.vector_store %arg7[%c2_36, %c0_37], %57 {strides = array<i32>} : memref<32x32xf32, #tpu.memory_space<vmem>>, vector<1x8xf32>,
    %59 = vector.extract_strided_slice %52 {offsets = [0, 24], sizes = [1, 8], strides = [1, 1]} : vector<1x544xf32> to vector<1x8xf32>
    %c3_38 = arith.constant 3 : index
    %c0_39 = arith.constant 0 : index
    %60 = vector.load %arg7[%c3_38, %c0_39] : memref<32x32xf32, #tpu.memory_space<vmem>>, vector<1x8xf32>
    tpu.vector_store %arg7[%c3_38, %c0_39], %59 {strides = array<i32>} : memref<32x32xf32, #tpu.memory_space<vmem>>, vector<1x8xf32>,
    %61 = vector.extract_strided_slice %52 {offsets = [0, 32], sizes = [1, 8], strides = [1, 1]} : vector<1x544xf32> to vector<1x8xf32>
    %c4_40 = arith.constant 4 : index
    %c0_41 = arith.constant 0 : index
    %62 = vector.load %arg7[%c4_40, %c0_41] : memref<32x32xf32, #tpu.memory_space<vmem>>, vector<1x8xf32>
    tpu.vector_store %arg7[%c4_40, %c0_41], %61 {strides = array<i32>} : memref<32x32xf32, #tpu.memory_space<vmem>>, vector<1x8xf32>,
    %63 = vector.extract_strided_slice %52 {offsets = [0, 40], sizes = [1, 8], strides = [1, 1]} : vector<1x544xf32> to vector<1x8xf32>
    %c5_42 = arith.constant 5 : index
    %c0_43 = arith.constant 0 : index
    %64 = vector.load %arg7[%c5_42, %c0_43] : memref<32x32xf32, #tpu.memory_space<vmem>>, vector<1x8xf32>
    tpu.vector_store %arg7[%c5_42, %c0_43], %63 {strides = array<i32>} : memref<32x32xf32, #tpu.memory_space<vmem>>, vector<1x8xf32>,
    %65 = vector.extract_strided_slice %52 {offsets = [0, 48], sizes = [1, 8], strides = [1, 1]} : vector<1x544xf32> to vector<1x8xf32>
    %c6_44 = arith.constant 6 : index
    %c0_45 = arith.constant 0 : index
    %66 = vector.load %arg7[%c6_44, %c0_45] : memref<32x32xf32, #tpu.memory_space<vmem>>, vector<1x8xf32>
    tpu.vector_store %arg7[%c6_44, %c0_45], %65 {strides = array<i32>} : memref<32x32xf32, #tpu.memory_space<vmem>>, vector<1x8xf32>,
    %67 = vector.extract_strided_slice %52 {offsets = [0, 56], sizes = [1, 8], strides = [1, 1]} : vector<1x544xf32> to vector<1x8xf32>
    %c7_46 = arith.constant 7 : index
    %c0_47 = arith.constant 0 : index
    %68 = vector.load %arg7[%c7_46, %c0_47] : memref<32x32xf32, #tpu.memory_space<vmem>>, vector<1x8xf32>
    tpu.vector_store %arg7[%c7_46, %c0_47], %67 {strides = array<i32>} : memref<32x32xf32, #tpu.memory_space<vmem>>, vector<1x8xf32>,
    %69 = vector.extract_strided_slice %52 {offsets = [0, 64], sizes = [1, 8], strides = [1, 1]} : vector<1x544xf32> to vector<1x8xf32>
    %c8_48 = arith.constant 8 : index
    %c0_49 = arith.constant 0 : index
    %70 = vector.load %arg7[%c8_48, %c0_49] : memref<32x32xf32, #tpu.memory_space<vmem>>, vector<1x8xf32>
    tpu.vector_store %arg7[%c8_48, %c0_49], %69 {strides = array<i32>} : memref<32x32xf32, #tpu.memory_space<vmem>>, vector<1x8xf32>,
    %71 = vector.extract_strided_slice %52 {offsets = [0, 72], sizes = [1, 8], strides = [1, 1]} : vector<1x544xf32> to vector<1x8xf32>
    %c9_50 = arith.constant 9 : index
    %c0_51 = arith.constant 0 : index
    %72 = vector.load %arg7[%c9_50, %c0_51] : memref<32x32xf32, #tpu.memory_space<vmem>>, vector<1x8xf32>
    tpu.vector_store %arg7[%c9_50, %c0_51], %71 {strides = array<i32>} : memref<32x32xf32, #tpu.memory_space<vmem>>, vector<1x8xf32>,
    %73 = vector.extract_strided_slice %52 {offsets = [0, 80], sizes = [1, 8], strides = [1, 1]} : vector<1x544xf32> to vector<1x8xf32>
    %c10_52 = arith.constant 10 : index
    %c0_53 = arith.constant 0 : index
    %74 = vector.load %arg7[%c10_52, %c0_53] : memref<32x32xf32, #tpu.memory_space<vmem>>, vector<1x8xf32>
    tpu.vector_store %arg7[%c10_52, %c0_53], %73 {strides = array<i32>} : memref<32x32xf32, #tpu.memory_space<vmem>>, vector<1x8xf32>,
    %75 = vector.extract_strided_slice %52 {offsets = [0, 88], sizes = [1, 8], strides = [1, 1]} : vector<1x544xf32> to vector<1x8xf32>
    %c11_54 = arith.constant 11 : index
    %c0_55 = arith.constant 0 : index
    %76 = vector.load %arg7[%c11_54, %c0_55] : memref<32x32xf32, #tpu.memory_space<vmem>>, vector<1x8xf32>
    tpu.vector_store %arg7[%c11_54, %c0_55], %75 {strides = array<i32>} : memref<32x32xf32, #tpu.memory_space<vmem>>, vector<1x8xf32>,
    %77 = vector.extract_strided_slice %52 {offsets = [0, 96], sizes = [1, 8], strides = [1, 1]} : vector<1x544xf32> to vector<1x8xf32>
    %c12_56 = arith.constant 12 : index
    %c0_57 = arith.constant 0 : index
    %78 = vector.load %arg7[%c12_56, %c0_57] : memref<32x32xf32, #tpu.memory_space<vmem>>, vector<1x8xf32>
    tpu.vector_store %arg7[%c12_56, %c0_57], %77 {strides = array<i32>} : memref<32x32xf32, #tpu.memory_space<vmem>>, vector<1x8xf32>,
    %79 = vector.extract_strided_slice %52 {offsets = [0, 104], sizes = [1, 8], strides = [1, 1]} : vector<1x544xf32> to vector<1x8xf32>
    %c13_58 = arith.constant 13 : index
    %c0_59 = arith.constant 0 : index
    %80 = vector.load %arg7[%c13_58, %c0_59] : memref<32x32xf32, #tpu.memory_space<vmem>>, vector<1x8xf32>
    tpu.vector_store %arg7[%c13_58, %c0_59], %79 {strides = array<i32>} : memref<32x32xf32, #tpu.memory_space<vmem>>, vector<1x8xf32>,
    %81 = vector.extract_strided_slice %52 {offsets = [0, 112], sizes = [1, 8], strides = [1, 1]} : vector<1x544xf32> to vector<1x8xf32>
    %c14_60 = arith.constant 14 : index
    %c0_61 = arith.constant 0 : index
    %82 = vector.load %arg7[%c14_60, %c0_61] : memref<32x32xf32, #tpu.memory_space<vmem>>, vector<1x8xf32>
    tpu.vector_store %arg7[%c14_60, %c0_61], %81 {strides = array<i32>} : memref<32x32xf32, #tpu.memory_space<vmem>>, vector<1x8xf32>,
    %83 = vector.extract_strided_slice %52 {offsets = [0, 120], sizes = [1, 8], strides = [1, 1]} : vector<1x544xf32> to vector<1x8xf32>
    %c15_62 = arith.constant 15 : index
    %c0_63 = arith.constant 0 : index
    %84 = vector.load %arg7[%c15_62, %c0_63] : memref<32x32xf32, #tpu.memory_space<vmem>>, vector<1x8xf32>
    tpu.vector_store %arg7[%c15_62, %c0_63], %83 {strides = array<i32>} : memref<32x32xf32, #tpu.memory_space<vmem>>, vector<1x8xf32>,
    %85 = vector.extract_strided_slice %52 {offsets = [0, 128], sizes = [1, 8], strides = [1, 1]} : vector<1x544xf32> to vector<1x8xf32>
    %c16 = arith.constant 16 : index
    %c0_64 = arith.constant 0 : index
    %86 = vector.load %arg7[%c16, %c0_64] : memref<32x32xf32, #tpu.memory_space<vmem>>, vector<1x8xf32>
    tpu.vector_store %arg7[%c16, %c0_64], %85 {strides = array<i32>} : memref<32x32xf32, #tpu.memory_space<vmem>>, vector<1x8xf32>,
    %87 = vector.extract_strided_slice %52 {offsets = [0, 136], sizes = [1, 8], strides = [1, 1]} : vector<1x544xf32> to vector<1x8xf32>
    %c17 = arith.constant 17 : index
    %c0_65 = arith.constant 0 : index
    %88 = vector.load %arg7[%c17, %c0_65] : memref<32x32xf32, #tpu.memory_space<vmem>>, vector<1x8xf32>
    tpu.vector_store %arg7[%c17, %c0_65], %87 {strides = array<i32>} : memref<32x32xf32, #tpu.memory_space<vmem>>, vector<1x8xf32>,
    %89 = vector.extract_strided_slice %52 {offsets = [0, 144], sizes = [1, 8], strides = [1, 1]} : vector<1x544xf32> to vector<1x8xf32>
    %c18 = arith.constant 18 : index
    %c0_66 = arith.constant 0 : index
    %90 = vector.load %arg7[%c18, %c0_66] : memref<32x32xf32, #tpu.memory_space<vmem>>, vector<1x8xf32>
    tpu.vector_store %arg7[%c18, %c0_66], %89 {strides = array<i32>} : memref<32x32xf32, #tpu.memory_space<vmem>>, vector<1x8xf32>,
    %91 = vector.extract_strided_slice %52 {offsets = [0, 152], sizes = [1, 8], strides = [1, 1]} : vector<1x544xf32> to vector<1x8xf32>
    %c19 = arith.constant 19 : index
    %c0_67 = arith.constant 0 : index
    %92 = vector.load %arg7[%c19, %c0_67] : memref<32x32xf32, #tpu.memory_space<vmem>>, vector<1x8xf32>
    tpu.vector_store %arg7[%c19, %c0_67], %91 {strides = array<i32>} : memref<32x32xf32, #tpu.memory_space<vmem>>, vector<1x8xf32>,
    %93 = vector.extract_strided_slice %52 {offsets = [0, 160], sizes = [1, 8], strides = [1, 1]} : vector<1x544xf32> to vector<1x8xf32>
    %c20 = arith.constant 20 : index
    %c0_68 = arith.constant 0 : index
    %94 = vector.load %arg7[%c20, %c0_68] : memref<32x32xf32, #tpu.memory_space<vmem>>, vector<1x8xf32>
    tpu.vector_store %arg7[%c20, %c0_68], %93 {strides = array<i32>} : memref<32x32xf32, #tpu.memory_space<vmem>>, vector<1x8xf32>,
    %95 = vector.extract_strided_slice %52 {offsets = [0, 168], sizes = [1, 8], strides = [1, 1]} : vector<1x544xf32> to vector<1x8xf32>
    %c21 = arith.constant 21 : index
    %c0_69 = arith.constant 0 : index
    %96 = vector.load %arg7[%c21, %c0_69] : memref<32x32xf32, #tpu.memory_space<vmem>>, vector<1x8xf32>
    tpu.vector_store %arg7[%c21, %c0_69], %95 {strides = array<i32>} : memref<32x32xf32, #tpu.memory_space<vmem>>, vector<1x8xf32>,
    %97 = vector.extract_strided_slice %52 {offsets = [0, 176], sizes = [1, 8], strides = [1, 1]} : vector<1x544xf32> to vector<1x8xf32>
    %c22 = arith.constant 22 : index
    %c0_70 = arith.constant 0 : index
    %98 = vector.load %arg7[%c22, %c0_70] : memref<32x32xf32, #tpu.memory_space<vmem>>, vector<1x8xf32>
    tpu.vector_store %arg7[%c22, %c0_70], %97 {strides = array<i32>} : memref<32x32xf32, #tpu.memory_space<vmem>>, vector<1x8xf32>,
    %99 = vector.extract_strided_slice %52 {offsets = [0, 184], sizes = [1, 8], strides = [1, 1]} : vector<1x544xf32> to vector<1x8xf32>
    %c23 = arith.constant 23 : index
    %c0_71 = arith.constant 0 : index
    %100 = vector.load %arg7[%c23, %c0_71] : memref<32x32xf32, #tpu.memory_space<vmem>>, vector<1x8xf32>
    tpu.vector_store %arg7[%c23, %c0_71], %99 {strides = array<i32>} : memref<32x32xf32, #tpu.memory_space<vmem>>, vector<1x8xf32>,
    %101 = vector.extract_strided_slice %52 {offsets = [0, 192], sizes = [1, 8], strides = [1, 1]} : vector<1x544xf32> to vector<1x8xf32>
    %c24 = arith.constant 24 : index
    %c0_72 = arith.constant 0 : index
    %102 = vector.load %arg7[%c24, %c0_72] : memref<32x32xf32, #tpu.memory_space<vmem>>, vector<1x8xf32>
    tpu.vector_store %arg7[%c24, %c0_72], %101 {strides = array<i32>} : memref<32x32xf32, #tpu.memory_space<vmem>>, vector<1x8xf32>,
    %103 = vector.extract_strided_slice %52 {offsets = [0, 200], sizes = [1, 8], strides = [1, 1]} : vector<1x544xf32> to vector<1x8xf32>
    %c25 = arith.constant 25 : index
    %c0_73 = arith.constant 0 : index
    %104 = vector.load %arg7[%c25, %c0_73] : memref<32x32xf32, #tpu.memory_space<vmem>>, vector<1x8xf32>
    tpu.vector_store %arg7[%c25, %c0_73], %103 {strides = array<i32>} : memref<32x32xf32, #tpu.memory_space<vmem>>, vector<1x8xf32>,
    %105 = vector.extract_strided_slice %52 {offsets = [0, 208], sizes = [1, 8], strides = [1, 1]} : vector<1x544xf32> to vector<1x8xf32>
    %c26 = arith.constant 26 : index
    %c0_74 = arith.constant 0 : index
    %106 = vector.load %arg7[%c26, %c0_74] : memref<32x32xf32, #tpu.memory_space<vmem>>, vector<1x8xf32>
    tpu.vector_store %arg7[%c26, %c0_74], %105 {strides = array<i32>} : memref<32x32xf32, #tpu.memory_space<vmem>>, vector<1x8xf32>,
    %107 = vector.extract_strided_slice %52 {offsets = [0, 216], sizes = [1, 8], strides = [1, 1]} : vector<1x544xf32> to vector<1x8xf32>
    %c27 = arith.constant 27 : index
    %c0_75 = arith.constant 0 : index
    %108 = vector.load %arg7[%c27, %c0_75] : memref<32x32xf32, #tpu.memory_space<vmem>>, vector<1x8xf32>
    tpu.vector_store %arg7[%c27, %c0_75], %107 {strides = array<i32>} : memref<32x32xf32, #tpu.memory_space<vmem>>, vector<1x8xf32>,
    %109 = vector.extract_strided_slice %52 {offsets = [0, 224], sizes = [1, 8], strides = [1, 1]} : vector<1x544xf32> to vector<1x8xf32>
    %c28 = arith.constant 28 : index
    %c0_76 = arith.constant 0 : index
    %110 = vector.load %arg7[%c28, %c0_76] : memref<32x32xf32, #tpu.memory_space<vmem>>, vector<1x8xf32>
    tpu.vector_store %arg7[%c28, %c0_76], %109 {strides = array<i32>} : memref<32x32xf32, #tpu.memory_space<vmem>>, vector<1x8xf32>,
    %111 = vector.extract_strided_slice %52 {offsets = [0, 232], sizes = [1, 8], strides = [1, 1]} : vector<1x544xf32> to vector<1x8xf32>
    %c29 = arith.constant 29 : index
    %c0_77 = arith.constant 0 : index
    %112 = vector.load %arg7[%c29, %c0_77] : memref<32x32xf32, #tpu.memory_space<vmem>>, vector<1x8xf32>
    tpu.vector_store %arg7[%c29, %c0_77], %111 {strides = array<i32>} : memref<32x32xf32, #tpu.memory_space<vmem>>, vector<1x8xf32>,
    %113 = vector.extract_strided_slice %52 {offsets = [0, 240], sizes = [1, 8], strides = [1, 1]} : vector<1x544xf32> to vector<1x8xf32>
    %c30 = arith.constant 30 : index
    %c0_78 = arith.constant 0 : index
    %114 = vector.load %arg7[%c30, %c0_78] : memref<32x32xf32, #tpu.memory_space<vmem>>, vector<1x8xf32>
    tpu.vector_store %arg7[%c30, %c0_78], %113 {strides = array<i32>} : memref<32x32xf32, #tpu.memory_space<vmem>>, vector<1x8xf32>,
    %115 = vector.extract_strided_slice %52 {offsets = [0, 248], sizes = [1, 8], strides = [1, 1]} : vector<1x544xf32> to vector<1x8xf32>
    %c31 = arith.constant 31 : index
    %c0_79 = arith.constant 0 : index
    %116 = vector.load %arg7[%c31, %c0_79] : memref<32x32xf32, #tpu.memory_space<vmem>>, vector<1x8xf32>
    tpu.vector_store %arg7[%c31, %c0_79], %115 {strides = array<i32>} : memref<32x32xf32, #tpu.memory_space<vmem>>, vector<1x8xf32>,
    %117 = vector.extract_strided_slice %52 {offsets = [0, 256], sizes = [1, 8], strides = [1, 1]} : vector<1x544xf32> to vector<1x8xf32>
    %c0_80 = arith.constant 0 : index
    %c0_81 = arith.constant 0 : index
    %118 = vector.load %arg7[%c0_80, %c0_81] : memref<32x32xf32, #tpu.memory_space<vmem>>, vector<32x8xf32>
    %cst_82 = arith.constant dense<0.000000e+00> : vector<2x8xf32>
    %119 = tpu.matmul %51, %118, %cst_82 {dimension_numbers = #tpu.dot_dimension_numbers<[1], [0], [0], [1], [0, 0, 1, 1], [], []>} : vector<2x32xf32>, vector<32x8xf32>, vector<2x8xf32> -> vector<2x8xf32>
    %120 = vector.broadcast %117 : vector<1x8xf32> to vector<2x8xf32>
    %121 = arith.addf %119, %120 : vector<2x8xf32>
    %c0_83 = arith.constant 0 : index
    %c0_84 = arith.constant 0 : index
    %122 = vector.load %arg6[%c0_83, %c0_84] : memref<2x8xf32, #tpu.memory_space<vmem>>, vector<2x8xf32>
    tpu.vector_store %arg6[%c0_83, %c0_84], %121 {strides = array<i32>} : memref<2x8xf32, #tpu.memory_space<vmem>>, vector<2x8xf32>,
    return
  }
  func.func @transform_0(%arg0: i32) -> (i32, i32) {
    %c0_i32 = arith.constant 0 : i32
    %c0_i32_0 = arith.constant 0 : i32
    %c0_i32_1 = arith.constant 0 : i32
    return %c0_i32, %c0_i32_0 : i32, i32
  }
  func.func @transform_1(%arg0: i32) -> (i32, i32) {
    %c0_i32 = arith.constant 0 : i32
    %c0_i32_0 = arith.constant 0 : i32
    %c0_i32_1 = arith.constant 0 : i32
    return %c0_i32, %c0_i32_0 : i32, i32
  }
  func.func @transform_2(%arg0: i32) -> (i32, i32) {
    %c0_i32 = arith.constant 0 : i32
    %c0_i32_0 = arith.constant 0 : i32
    %c0_i32_1 = arith.constant 0 : i32
    return %c0_i32, %c0_i32_0 : i32, i32
  }
  func.func @transform_3(%arg0: i32) -> (i32, i32) {
    %c0_i32 = arith.constant 0 : i32
    %c0_i32_0 = arith.constant 0 : i32
    %c0_i32_1 = arith.constant 0 : i32
    return %c0_i32, %c0_i32_0 : i32, i32
  }
  func.func @transform_4(%arg0: i32) -> (i32, i32) {
    %c0_i32 = arith.constant 0 : i32
    %c0_i32_0 = arith.constant 0 : i32
    %c0_i32_1 = arith.constant 0 : i32
    return %c0_i32, %c0_i32_0 : i32, i32
  }
  func.func @transform_5(%arg0: i32) -> (i32, i32) {
    %c0_i32 = arith.constant 0 : i32
    %c0_i32_0 = arith.constant 0 : i32
    %c0_i32_1 = arith.constant 0 : i32
    return %c0_i32, %c0_i32_0 : i32, i32
  }
}

</mosaic_0001>

<llo_original>
// kernel: tpu_custom_call.1
$region0: #{tpu_custom_call.1}
  #allocation0 [shape = 'u32[]', space=smem, size = 0x4, offset = 0x4, fixed_abs, tag = 'smem constant byte address 0x4 - core index']
  #allocation1 [shape = 'u32[144,128]{1,0:T(1,128)}', space=vmem, size = 0x12000, scoped, tag = 'internal scratch']
  #allocation2 [shape = 'f32[32,32]{1,0:T(8,128)}', space=vmem, size = 0x4000, scoped, tag = 'scratch operand']
  %s0 = inlined_call_operand.hbm [shape: f32[2,16], index: 0, kind: input, shape index: {}]
  %s1 = inlined_call_operand.vmem [shape: f32[2,17], index: 1, kind: input, shape index: {}]
  %s2 = inlined_call_operand.hbm [shape: f32[17,64], index: 2, kind: input, shape index: {}]
  %s3 = inlined_call_operand.hbm [shape: bf16[64,544], index: 3, kind: input, shape index: {}]
  %s4 = inlined_call_operand.vmem [shape: f32[1,544], index: 4, kind: input, shape index: {}]
  %s5 = inlined_call_operand.hbm [shape: f32[2,8], index: 5, kind: output, shape index: {}]
  %s6 = sld [smem:[#allocation0]]
  $region42: #{tpu_custom_call.1} parent=0
    _
  %s8 = ssub.s32 1, %s6
  %s9 = scalar_select 0, %s8, %s6
  $region1: #{tpu_custom_call.1} parent=0
    #allocation3 [shape = 'u8[1024]{0}', space=vmem, size = 0x400, scoped, tag = 'input window, operand 0, single buffered']
    #allocation4 [shape = 's32[1]{0}', space=sflag, size = 0x4, scoped, tag = 'scoped memory for tpu_custom_call.1']
    #allocation5 [shape = 's32[1]{0}', space=sflag, size = 0x4, scoped, tag = 'scoped memory for tpu_custom_call.1']
    #allocation6 [shape = 'u8[12288]{0}', space=vmem, size = 0x3000, scoped, tag = 'input window, operand 2, single buffered']
    #allocation7 [shape = 's32[1]{0}', space=sflag, size = 0x4, scoped, tag = 'scoped memory for tpu_custom_call.1']
    #allocation8 [shape = 'u8[81920]{0}', space=vmem, size = 0x14000, scoped, tag = 'input window, operand 3, single buffered']
    #allocation9 [shape = 'u8[1024]{0}', space=vmem, size = 0x400, scoped, tag = 'output window, operand 0, single buffered']
    %10 = vsyncpa [#allocation4], 0
    %11 = vsyncpa [#allocation7], 0
    %12 = vsyncpa [#allocation5], 0
    // Predicated region
    $region2: #{tpu_custom_call.1} parent=1 // pred_check
      _
    $region3: #{tpu_custom_call.1} parent=1 // pred_check_branch
      %14 = sbr.rel (0) target = $region5
    $region4: #{tpu_custom_call.1} parent=1 // pred_region
      %s16 = ssub.s32 32, 32
      %17 = vsyncadd [#allocation4], %s16
      %s19 = sshll.u32 [#allocation3], 4
      %s20 = int_to_ptr.vmem [resolvable:$true] %s19
      %22 = dma.hbm_to_vmem [thread:$0]  %s0, 32, %s20, [#allocation4]
    $region5: #{tpu_custom_call.1} parent=1 // pred_fallthru
      _
    // Predicated region
    $region6: #{tpu_custom_call.1} parent=1 // pred_check
      _
    $region7: #{tpu_custom_call.1} parent=1 // pred_check_branch
      %24 = sbr.rel (0) target = $region9
    $region8: #{tpu_custom_call.1} parent=1 // pred_region
      _
    $region9: #{tpu_custom_call.1} parent=1 // pred_fallthru
      _
    // Predicated region
    $region10: #{tpu_custom_call.1} parent=1 // pred_check
      _
    $region11: #{tpu_custom_call.1} parent=1 // pred_check_branch
      %26 = sbr.rel (0) target = $region13
    $region12: #{tpu_custom_call.1} parent=1 // pred_region
      %s28 = ssub.s32 384, 384
      %29 = vsyncadd [#allocation7], %s28
      %s30 = sshll.u32 [#allocation6], 4
      %s31 = int_to_ptr.vmem [resolvable:$true] %s30
      %36 = dma.hbm_to_vmem [thread:$0]  %s2, 384, %s31, [#allocation7], 128, 128, 8
    $region13: #{tpu_custom_call.1} parent=1 // pred_fallthru
      _
    // Predicated region
    $region14: #{tpu_custom_call.1} parent=1 // pred_check
      _
    $region15: #{tpu_custom_call.1} parent=1 // pred_check_branch
      %38 = sbr.rel (0) target = $region17
    $region16: #{tpu_custom_call.1} parent=1 // pred_region
      %s40 = ssub.s32 2560, 2560
      %41 = vsyncadd [#allocation7], %s40
      %s42 = sshll.u32 [#allocation8], 4
      %s43 = int_to_ptr.vmem [resolvable:$true] %s42
      %48 = dma.hbm_to_vmem [thread:$0]  %s3, 2560, %s43, [#allocation7], 320, 320, 20
    $region17: #{tpu_custom_call.1} parent=1 // pred_fallthru
      _
    // Predicated region
    $region18: #{tpu_custom_call.1} parent=1 // pred_check
      _
    $region19: #{tpu_custom_call.1} parent=1 // pred_check_branch
      %50 = sbr.rel (0) target = $region21
    $region20: #{tpu_custom_call.1} parent=1 // pred_region
      _
    $region21: #{tpu_custom_call.1} parent=1 // pred_fallthru
      _
    // Predicated region
    $region22: #{tpu_custom_call.1} parent=1 // pred_check
      _
    $region23: #{tpu_custom_call.1} parent=1 // pred_check_branch
      %52 = sbr.rel (0) target = $region25
    $region24: #{tpu_custom_call.1} parent=1 // pred_region
      %53 = dma.done [#allocation4], 32
    $region25: #{tpu_custom_call.1} parent=1 // pred_fallthru
      _
    // Predicated region
    $region26: #{tpu_custom_call.1} parent=1 // pred_check
      _
    $region27: #{tpu_custom_call.1} parent=1 // pred_check_branch
      %55 = sbr.rel (0) target = $region29
    $region28: #{tpu_custom_call.1} parent=1 // pred_region
      %56 = dma.done [#allocation7], 384
    $region29: #{tpu_custom_call.1} parent=1 // pred_fallthru
      _
    // Predicated region
    $region30: #{tpu_custom_call.1} parent=1 // pred_check
      _
    $region31: #{tpu_custom_call.1} parent=1 // pred_check_branch
      %58 = sbr.rel (0) target = $region33
    $region32: #{tpu_custom_call.1} parent=1 // pred_region
      %59 = dma.done [#allocation7], 2560
    $region33: #{tpu_custom_call.1} parent=1 // pred_fallthru
      _
    %v61 = vld [vmem:[%s1] sm:$0x3]
    %v62 = vld [vmem:[#allocation6] sm:$0xff]
    %v63 = vld [vmem:[#allocation6 + $0x8] sm:$0xff]
    %v64 = vld [vmem:[#allocation6 + $0x10] sm:$0x1]
    %vm65 = vcmask 138240
    %v67 = vsel %vm65, %v61, 0
    %vm69 = vcmask 1040384
    %v71 = vsel %vm69, %v64, 0
    %73 = vmatprep.subr.mxu0 0.0
    %74 = vmatpush1.msra.mxu0 %v62
    %75 = vmatprep.subr.mxu0 0.0
    %76 = vmatpush1.msra.mxu0 %v63
    %77 = vmatprep.subr.mxu0 0.0
    %78 = vmatpush1.msra.mxu0 %v71
    %79 = vmatprep.subr.mxu0 0.0
    %80 = vmatpush1.msra.mxu0 0.0
    %81 = vmatprep.subr.mxu0 0.0
    %82 = vmatpush1.msra.mxu0 0.0
    %83 = vmatprep.subr.mxu0 0.0
    %84 = vmatpush1.msra.mxu0 0.0
    %85 = vmatprep.subr.mxu0 0.0
    %86 = vmatpush1.msra.mxu0 0.0
    %87 = vmatprep.subr.mxu0 0.0
    %88 = vmatpush1.msra.mxu0 0.0
    %89 = vmatprep.subr.mxu0 0.0
    %90 = vmatpush1.msra.mxu0 0.0
    %91 = vmatprep.subr.mxu0 0.0
    %92 = vmatpush1.msra.mxu0 0.0
    %93 = vmatprep.subr.mxu0 0.0
    %94 = vmatpush1.msra.mxu0 0.0
    %95 = vmatprep.subr.mxu0 0.0
    %96 = vmatpush1.msra.mxu0 0.0
    %97 = vmatprep.subr.mxu0 0.0
    %98 = vmatpush1.msra.mxu0 0.0
    %99 = vmatprep.subr.mxu0 0.0
    %100 = vmatpush1.msra.mxu0 0.0
    %101 = vmatprep.subr.mxu0 0.0
    %102 = vmatpush1.msra.mxu0 0.0
    %103 = vmatprep.subr.mxu0 0.0
    %104 = vmatpush1.msra.mxu0 0.0
    %105 = vmatprep.subr.mxu0 0.0
    %106 = vmatpush1.msra.mxu0 0.0
    %107 = vmatprep.subr.mxu0 0.0
    %108 = vmatpush1.msra.mxu0 0.0
    %109 = vmatprep.subr.mxu0 0.0
    %110 = vmatpush1.msra.mxu0 0.0
    %111 = vmatprep.subr.mxu0 0.0
    %112 = vmatpush1.msra.mxu0 0.0
    %113 = vmatprep.subr.mxu0 0.0
    %114 = vmatpush1.msra.mxu0 0.0
    %115 = vmatprep.subr.mxu0 0.0
    %116 = vmatpush1.msra.mxu0 0.0
    %117 = vmatprep.subr.mxu0 0.0
    %118 = vmatpush1.msra.mxu0 0.0
    %119 = vmatprep.subr.mxu0 0.0
    %120 = vmatpush1.msra.mxu0 0.0
    %121 = vmatprep.subr.mxu0 0.0
    %122 = vmatpush1.msra.mxu0 0.0
    %123 = vmatprep.subr.mxu0 0.0
    %124 = vmatpush1.msra.mxu0 0.0
    %125 = vmatprep.subr.mxu0 0.0
    %126 = vmatpush1.msra.mxu0 0.0
    %127 = vmatprep.subr.mxu0 0.0
    %128 = vmatpush1.msra.mxu0 0.0
    %129 = vmatprep.subr.mxu0 0.0
    %130 = vmatpush1.msra.mxu0 0.0
    %131 = vmatprep.subr.mxu0 0.0
    %132 = vmatpush1.msra.mxu0 0.0
    %133 = vmatprep.subr.mxu0 0.0
    %134 = vmatpush1.msra.mxu0 0.0
    %135 = vmatprep.subr.mxu0 0.0
    %136 = vmatpush1.msra.mxu0 0.0
    %137 = vmatprep.mubr.f32.mxu0 0.0
    %138 = vmatmul.mubr.f32.gmra.mrb[0].mxu0 %v67
    %v139 = vpop.f32.mrb[0].mxu0
    %v140 = vadd.f32 0.0, %v139
    %v141 = vpop.f32.mrb[0].mxu0
    %142 = vdwg.mxu0
    %v143 = vmax.f32 %v140, 0.0
    %v144 = vpack.c.bf16 %v143, %v143
    %v145 = vld [vmem:[#allocation8] sm:$0xff]
    %v146 = vld [vmem:[#allocation8 + $0x8] sm:$0xff]
    %v147 = vld [vmem:[#allocation8 + $0x10] sm:$0xf]
    %v148 = vld [vmem:[#allocation8 + $0x14] sm:$0xff]
    %v149 = vld [vmem:[#allocation8 + $0x1c] sm:$0xff]
    %v150 = vld [vmem:[#allocation8 + $0x24] sm:$0xf]
    %v151 = vld [vmem:[#allocation8 + $0x28] sm:$0xff]
    %v152 = vld [vmem:[#allocation8 + $0x30] sm:$0xff]
    %v153 = vld [vmem:[#allocation8 + $0x38] sm:$0xf]
    %v154 = vld [vmem:[#allocation8 + $0x3c] sm:$0xff]
    %v155 = vld [vmem:[#allocation8 + $0x44] sm:$0xff]
    %v156 = vld [vmem:[#allocation8 + $0x4c] sm:$0xf]
    %v157 = vld [vmem:[#allocation8 + $0x50] sm:$0xff]
    %v158 = vld [vmem:[#allocation8 + $0x58] sm:$0xff]
    %v159 = vld [vmem:[#allocation8 + $0x60] sm:$0xf]
    %v160 = vld [vmem:[#allocation8 + $0x64] sm:$0xff]
    %v161 = vld [vmem:[#allocation8 + $0x6c] sm:$0xff]
    %v162 = vld [vmem:[#allocation8 + $0x74] sm:$0xf]
    %v163 = vld [vmem:[#allocation8 + $0x78] sm:$0xff]
    %v164 = vld [vmem:[#allocation8 + $0x80] sm:$0xff]
    %v165 = vld [vmem:[#allocation8 + $0x88] sm:$0xf]
    %v166 = vld [vmem:[#allocation8 + $0x8c] sm:$0xff]
    %v167 = vld [vmem:[#allocation8 + $0x94] sm:$0xff]
    %v168 = vld [vmem:[#allocation8 + $0x9c] sm:$0xf]
    %v169 = vld [vmem:[%s4] sm:$0x1f]
    %v171 = vlaneseq
    %v172 = vshrl.u32 %v171, 7
    %v173 = vsub.s32 0, %v172
    %v174 = vrot.slane %v169, %v173
    %v175 = vlaneseq
    %v176 = vshrl.u32 %v175, 7
    %v177 = vsub.s32 1, %v176
    %v178 = vrot.slane %v169, %v177
    %v179 = vlaneseq
    %v180 = vshrl.u32 %v179, 7
    %v181 = vsub.s32 2, %v180
    %v182 = vrot.slane %v169, %v181
    %v183 = vlaneseq
    %v184 = vshrl.u32 %v183, 7
    %v185 = vsub.s32 3, %v184
    %v186 = vrot.slane %v169, %v185
    %v187 = vlaneseq
    %v188 = vshrl.u32 %v187, 7
    %v189 = vsub.s32 4, %v188
    %v190 = vrot.slane %v169, %v189
    %v220 = vunpack.c.l.b16 %v145
    %v221 = vunpack.c.h.b16 %v145
    %v222 = vunpack.c.l.b16 %v146
    %v223 = vunpack.c.h.b16 %v146
    %v224 = vunpack.c.l.b16 %v147
    %v225 = vunpack.c.l.b16 %v148
    %v226 = vunpack.c.h.b16 %v148
    %v227 = vunpack.c.l.b16 %v149
    %v228 = vunpack.c.h.b16 %v149
    %v229 = vunpack.c.l.b16 %v150
    %v230 = vunpack.c.l.b16 %v151
    %v231 = vunpack.c.h.b16 %v151
    %v232 = vunpack.c.l.b16 %v152
    %v233 = vunpack.c.h.b16 %v152
    %v234 = vunpack.c.l.b16 %v153
    %v235 = vunpack.c.l.b16 %v154
    %v236 = vunpack.c.h.b16 %v154
    %v237 = vunpack.c.l.b16 %v155
    %v238 = vunpack.c.h.b16 %v155
    %v239 = vunpack.c.l.b16 %v156
    %v240 = vunpack.c.l.b16 %v157
    %v241 = vunpack.c.h.b16 %v157
    %v242 = vunpack.c.l.b16 %v158
    %v243 = vunpack.c.h.b16 %v158
    %v244 = vunpack.c.l.b16 %v159
    %v245 = vunpack.c.l.b16 %v160
    %v246 = vunpack.c.h.b16 %v160
    %v247 = vunpack.c.l.b16 %v161
    %v248 = vunpack.c.h.b16 %v161
    %v249 = vunpack.c.l.b16 %v162
    %v250 = vunpack.c.l.b16 %v163
    %v251 = vunpack.c.h.b16 %v163
    %v252 = vunpack.c.l.b16 %v164
    %v253 = vunpack.c.h.b16 %v164
    %v254 = vunpack.c.l.b16 %v165
    %v255 = vunpack.c.l.b16 %v166
    %v256 = vunpack.c.h.b16 %v166
    %v257 = vunpack.c.l.b16 %v167
    %v258 = vunpack.c.h.b16 %v167
    %v259 = vunpack.c.l.b16 %v168
    %v260 = vpack.c.b16 %v225, %v220
    %v261 = vpack.c.b16 %v226, %v221
    %v262 = vpack.c.b16 %v227, %v222
    %v263 = vpack.c.b16 %v228, %v223
    %v264 = vpack.c.b16 %v229, %v224
    %v265 = vpack.c.b16 %v235, %v230
    %v266 = vpack.c.b16 %v236, %v231
    %v267 = vpack.c.b16 %v237, %v232
    %v268 = vpack.c.b16 %v238, %v233
    %v269 = vpack.c.b16 %v239, %v234
    %v270 = vpack.c.b16 %v245, %v240
    %v271 = vpack.c.b16 %v246, %v241
    %v272 = vpack.c.b16 %v247, %v242
    %v273 = vpack.c.b16 %v248, %v243
    %v274 = vpack.c.b16 %v249, %v244
    %v275 = vpack.c.b16 %v255, %v250
    %v276 = vpack.c.b16 %v256, %v251
    %v277 = vpack.c.b16 %v257, %v252
    %v278 = vpack.c.b16 %v258, %v253
    %v279 = vpack.c.b16 %v259, %v254
    %vm300 = vcmask 523264
    %v302 = vsel %vm300, %v144, 0
    %304 = vmatprep.subr.bf16.mxu0 %v261
    %305 = vmatpush1.bf16.msra.mxu0 %v260
    %306 = vmatprep.subr.bf16.mxu0 %v266
    %307 = vmatpush1.bf16.msra.mxu0 %v265
    %308 = vmatprep.subr.bf16.mxu0 %v271
    %309 = vmatpush1.bf16.msra.mxu0 %v270
    %310 = vmatprep.subr.bf16.mxu0 %v276
    %311 = vmatpush1.bf16.msra.mxu0 %v275
    %312 = vmatprep.subr.bf16.mxu0 0
    %313 = vmatpush1.bf16.msra.mxu0 0
    %314 = vmatprep.subr.bf16.mxu0 0
    %315 = vmatpush1.bf16.msra.mxu0 0
    %316 = vmatprep.subr.bf16.mxu0 0
    %317 = vmatpush1.bf16.msra.mxu0 0
    %318 = vmatprep.subr.bf16.mxu0 0
    %319 = vmatpush1.bf16.msra.mxu0 0
    %320 = vmatprep.subr.bf16.mxu0 0
    %321 = vmatpush1.bf16.msra.mxu0 0
    %322 = vmatprep.subr.bf16.mxu0 0
    %323 = vmatpush1.bf16.msra.mxu0 0
    %324 = vmatprep.subr.bf16.mxu0 0
    %325 = vmatpush1.bf16.msra.mxu0 0
    %326 = vmatprep.subr.bf16.mxu0 0
    %327 = vmatpush1.bf16.msra.mxu0 0
    %328 = vmatprep.subr.bf16.mxu0 0
    %329 = vmatpush1.bf16.msra.mxu0 0
    %330 = vmatprep.subr.bf16.mxu0 0
    %331 = vmatpush1.bf16.msra.mxu0 0
    %332 = vmatprep.subr.bf16.mxu0 0
    %333 = vmatpush1.bf16.msra.mxu0 0
    %334 = vmatprep.subr.bf16.mxu0 0
    %335 = vmatpush1.bf16.msra.mxu0 0
    %336 = vmatprep.mubr.bf16.mxu0 0
    %337 = vmatmul.mubr.bf16.gmra.mrb[0].mxu0 %v302
    %v338 = vpop.f32.mrb[0].mxu0
    %v339 = vadd.f32 %v174, %v338
    %v340 = vpop.f32.mrb[0].mxu0
    %v341 = vadd.f32 %v178, %v340
    %v342 = vpop.f32.mrb[0].mxu0
    %v343 = vpop.f32.mrb[0].mxu0
    %344 = vdwg.mxu0
    %345 = vmatprep.subr.bf16.mxu0 %v263
    %346 = vmatpush1.bf16.msra.mxu0 %v262
    %347 = vmatprep.subr.bf16.mxu0 %v268
    %348 = vmatpush1.bf16.msra.mxu0 %v267
    %349 = vmatprep.subr.bf16.mxu0 %v273
    %350 = vmatpush1.bf16.msra.mxu0 %v272
    %351 = vmatprep.subr.bf16.mxu0 %v278
    %352 = vmatpush1.bf16.msra.mxu0 %v277
    %353 = vmatprep.subr.bf16.mxu0 0
    %354 = vmatpush1.bf16.msra.mxu0 0
    %355 = vmatprep.subr.bf16.mxu0 0
    %356 = vmatpush1.bf16.msra.mxu0 0
    %357 = vmatprep.subr.bf16.mxu0 0
    %358 = vmatpush1.bf16.msra.mxu0 0
    %359 = vmatprep.subr.bf16.mxu0 0
    %360 = vmatpush1.bf16.msra.mxu0 0
    %361 = vmatprep.subr.bf16.mxu0 0
    %362 = vmatpush1.bf16.msra.mxu0 0
    %363 = vmatprep.subr.bf16.mxu0 0
    %364 = vmatpush1.bf16.msra.mxu0 0
    %365 = vmatprep.subr.bf16.mxu0 0
    %366 = vmatpush1.bf16.msra.mxu0 0
    %367 = vmatprep.subr.bf16.mxu0 0
    %368 = vmatpush1.bf16.msra.mxu0 0
    %369 = vmatprep.subr.bf16.mxu0 0
    %370 = vmatpush1.bf16.msra.mxu0 0
    %371 = vmatprep.subr.bf16.mxu0 0
    %372 = vmatpush1.bf16.msra.mxu0 0
    %373 = vmatprep.subr.bf16.mxu0 0
    %374 = vmatpush1.bf16.msra.mxu0 0
    %375 = vmatprep.subr.bf16.mxu0 0
    %376 = vmatpush1.bf16.msra.mxu0 0
    %377 = vmatprep.mubr.bf16.mxu0 0
    %378 = vmatmul.mubr.bf16.gmra.mrb[0].mxu0 %v302
    %v379 = vpop.f32.mrb[0].mxu0
    %v380 = vadd.f32 %v182, %v379
    %v381 = vpop.f32.mrb[0].mxu0
    %v382 = vadd.f32 %v186, %v381
    %v383 = vpop.f32.mrb[0].mxu0
    %v384 = vpop.f32.mrb[0].mxu0
    %385 = vdwg.mxu0
    %386 = vmatprep.subr.bf16.mxu0 0
    %387 = vmatpush1.bf16.msra.mxu0 %v264
    %388 = vmatprep.subr.bf16.mxu0 0
    %389 = vmatpush1.bf16.msra.mxu0 %v269
    %390 = vmatprep.subr.bf16.mxu0 0
    %391 = vmatpush1.bf16.msra.mxu0 %v274
    %392 = vmatprep.subr.bf16.mxu0 0
    %393 = vmatpush1.bf16.msra.mxu0 %v279
    %394 = vmatprep.subr.bf16.mxu0 0
    %395 = vmatpush1.bf16.msra.mxu0 0
    %396 = vmatprep.subr.bf16.mxu0 0
    %397 = vmatpush1.bf16.msra.mxu0 0
    %398 = vmatprep.subr.bf16.mxu0 0
    %399 = vmatpush1.bf16.msra.mxu0 0
    %400 = vmatprep.subr.bf16.mxu0 0
    %401 = vmatpush1.bf16.msra.mxu0 0
    %402 = vmatprep.subr.bf16.mxu0 0
    %403 = vmatpush1.bf16.msra.mxu0 0
    %404 = vmatprep.subr.bf16.mxu0 0
    %405 = vmatpush1.bf16.msra.mxu0 0
    %406 = vmatprep.subr.bf16.mxu0 0
    %407 = vmatpush1.bf16.msra.mxu0 0
    %408 = vmatprep.subr.bf16.mxu0 0
    %409 = vmatpush1.bf16.msra.mxu0 0
    %410 = vmatprep.subr.bf16.mxu0 0
    %411 = vmatpush1.bf16.msra.mxu0 0
    %412 = vmatprep.subr.bf16.mxu0 0
    %413 = vmatpush1.bf16.msra.mxu0 0
    %414 = vmatprep.subr.bf16.mxu0 0
    %415 = vmatpush1.bf16.msra.mxu0 0
    %416 = vmatprep.subr.bf16.mxu0 0
    %417 = vmatpush1.bf16.msra.mxu0 0
    %418 = vmatprep.mubr.bf16.mxu0 0
    %419 = vmatmul.mubr.bf16.gmra.mrb[0].mxu0 %v302
    %v420 = vpop.f32.mrb[0].mxu0
    %v421 = vadd.f32 %v190, %v420
    %v422 = vpop.f32.mrb[0].mxu0
    %v423 = vpop.f32.mrb[0].mxu0
    %v424 = vpop.f32.mrb[0].mxu0
    %425 = vdwg.mxu0
    %v426 = vld [vmem:[#allocation3] sm:$0x3]
    %vm427 = vcmask 253952
    %428 = vst.msk [vmem:[#allocation2] sm:$0x1] %vm427, %v339
    %430 = vrot.lane.b32.xlu0 %v339, 96
    %v431 = vpop.permute.xlu0 %430
    %433 = vst.msk [vmem:[#allocation2 + $0x1] sm:$0x1] %vm427, %v431
    %434 = vrot.lane.b32.xlu0 %v339, 64
    %v435 = vpop.permute.xlu0 %434
    %437 = vst.msk [vmem:[#allocation2 + $0x2] sm:$0x1] %vm427, %v435
    %438 = vrot.lane.b32.xlu0 %v339, 32
    %v439 = vpop.permute.xlu0 %438
    %441 = vst.msk [vmem:[#allocation2 + $0x3] sm:$0x1] %vm427, %v439
    %442 = vst.msk [vmem:[#allocation2 + $0x4] sm:$0x1] %vm427, %v341
    %444 = vrot.lane.b32.xlu0 %v341, 96
    %v445 = vpop.permute.xlu0 %444
    %447 = vst.msk [vmem:[#allocation2 + $0x5] sm:$0x1] %vm427, %v445
    %448 = vrot.lane.b32.xlu0 %v341, 64
    %v449 = vpop.permute.xlu0 %448
    %451 = vst.msk [vmem:[#allocation2 + $0x6] sm:$0x1] %vm427, %v449
    %452 = vrot.lane.b32.xlu0 %v341, 32
    %v453 = vpop.permute.xlu0 %452
    %455 = vst.msk [vmem:[#allocation2 + $0x7] sm:$0x1] %vm427, %v453
    %456 = vst.msk [vmem:[#allocation2 + $0x8] sm:$0x1] %vm427, %v380
    %458 = vrot.lane.b32.xlu0 %v380, 96
    %v459 = vpop.permute.xlu0 %458
    %461 = vst.msk [vmem:[#allocation2 + $0x9] sm:$0x1] %vm427, %v459
    %462 = vrot.lane.b32.xlu0 %v380, 64
    %v463 = vpop.permute.xlu0 %462
    %465 = vst.msk [vmem:[#allocation2 + $0xa] sm:$0x1] %vm427, %v463
    %466 = vrot.lane.b32.xlu0 %v380, 32
    %v467 = vpop.permute.xlu0 %466
    %469 = vst.msk [vmem:[#allocation2 + $0xb] sm:$0x1] %vm427, %v467
    %470 = vst.msk [vmem:[#allocation2 + $0xc] sm:$0x1] %vm427, %v382
    %472 = vrot.lane.b32.xlu0 %v382, 96
    %v473 = vpop.permute.xlu0 %472
    %475 = vst.msk [vmem:[#allocation2 + $0xd] sm:$0x1] %vm427, %v473
    %476 = vrot.lane.b32.xlu0 %v382, 64
    %v477 = vpop.permute.xlu0 %476
    %479 = vst.msk [vmem:[#allocation2 + $0xe] sm:$0x1] %vm427, %v477
    %480 = vrot.lane.b32.xlu0 %v382, 32
    %v481 = vpop.permute.xlu0 %480
    %483 = vst.msk [vmem:[#allocation2 + $0xf] sm:$0x1] %vm427, %v481
    %v484 = vld [vmem:[#allocation2] sm:$0xff]
    %v485 = vld [vmem:[#allocation2 + $0x8] sm:$0xff]
    %v486 = vlaneseq
    %v487 = vshrl.u32 %v486, 7
    %v488 = vsub.s32 0, %v487
    %v489 = vrot.slane %v421, %v488
    %vm490 = vcmask 130048
    %v492 = vsel %vm490, %v426, 0
    %494 = vmatprep.subr.mxu0 0.0
    %495 = vmatpush1.msra.mxu0 %v484
    %496 = vmatprep.subr.mxu0 0.0
    %497 = vmatpush1.msra.mxu0 %v485
    %498 = vmatprep.subr.mxu0 0.0
    %499 = vmatpush1.msra.mxu0 0.0
    %500 = vmatprep.subr.mxu0 0.0
    %501 = vmatpush1.msra.mxu0 0.0
    %502 = vmatprep.subr.mxu0 0.0
    %503 = vmatpush1.msra.mxu0 0.0
    %504 = vmatprep.subr.mxu0 0.0
    %505 = vmatpush1.msra.mxu0 0.0
    %506 = vmatprep.subr.mxu0 0.0
    %507 = vmatpush1.msra.mxu0 0.0
    %508 = vmatprep.subr.mxu0 0.0
    %509 = vmatpush1.msra.mxu0 0.0
    %510 = vmatprep.subr.mxu0 0.0
    %511 = vmatpush1.msra.mxu0 0.0
    %512 = vmatprep.subr.mxu0 0.0
    %513 = vmatpush1.msra.mxu0 0.0
    %514 = vmatprep.subr.mxu0 0.0
    %515 = vmatpush1.msra.mxu0 0.0
    %516 = vmatprep.subr.mxu0 0.0
    %517 = vmatpush1.msra.mxu0 0.0
    %518 = vmatprep.subr.mxu0 0.0
    %519 = vmatpush1.msra.mxu0 0.0
    %520 = vmatprep.subr.mxu0 0.0
    %521 = vmatpush1.msra.mxu0 0.0
    %522 = vmatprep.subr.mxu0 0.0
    %523 = vmatpush1.msra.mxu0 0.0
    %524 = vmatprep.subr.mxu0 0.0
    %525 = vmatpush1.msra.mxu0 0.0
    %526 = vmatprep.subr.mxu0 0.0
    %527 = vmatpush1.msra.mxu0 0.0
    %528 = vmatprep.subr.mxu0 0.0
    %529 = vmatpush1.msra.mxu0 0.0
    %530 = vmatprep.subr.mxu0 0.0
    %531 = vmatpush1.msra.mxu0 0.0
    %532 = vmatprep.subr.mxu0 0.0
    %533 = vmatpush1.msra.mxu0 0.0
    %534 = vmatprep.subr.mxu0 0.0
    %535 = vmatpush1.msra.mxu0 0.0
    %536 = vmatprep.subr.mxu0 0.0
    %537 = vmatpush1.msra.mxu0 0.0
    %538 = vmatprep.subr.mxu0 0.0
    %539 = vmatpush1.msra.mxu0 0.0
    %540 = vmatprep.subr.mxu0 0.0
    %541 = vmatpush1.msra.mxu0 0.0
    %542 = vmatprep.subr.mxu0 0.0
    %543 = vmatpush1.msra.mxu0 0.0
    %544 = vmatprep.subr.mxu0 0.0
    %545 = vmatpush1.msra.mxu0 0.0
    %546 = vmatprep.subr.mxu0 0.0
    %547 = vmatpush1.msra.mxu0 0.0
    %548 = vmatprep.subr.mxu0 0.0
    %549 = vmatpush1.msra.mxu0 0.0
    %550 = vmatprep.subr.mxu0 0.0
    %551 = vmatpush1.msra.mxu0 0.0
    %552 = vmatprep.subr.mxu0 0.0
    %553 = vmatpush1.msra.mxu0 0.0
    %554 = vmatprep.subr.mxu0 0.0
    %555 = vmatpush1.msra.mxu0 0.0
    %556 = vmatprep.subr.mxu0 0.0
    %557 = vmatpush1.msra.mxu0 0.0
    %558 = vmatprep.mubr.f32.mxu0 0.0
    %559 = vmatmul.mubr.f32.gmra.mrb[0].mxu0 %v492
    %v560 = vpop.f32.mrb[0].mxu0
    %v561 = vadd.f32 %v489, %v560
    %v562 = vpop.f32.mrb[0].mxu0
    %563 = vdwg.mxu0
    %v564 = vmax.f32 %v561, 0.0
    %vm565 = vcmask 58369
    %566 = vst.msk [vmem:[#allocation2 - $0x1] sm:$0x2] %vm565, %v339
    %567 = vrot.lane.b32.xlu0 %v339, 120
    %v568 = vpop.permute.xlu0 %567
    %570 = vst.msk [vmem:[#allocation2] sm:$0x2] %vm565, %v568
    %571 = vrot.lane.b32.xlu0 %v339, 112
    %v572 = vpop.permute.xlu0 %571
    %574 = vst.msk [vmem:[#allocation2 + $0x1] sm:$0x2] %vm565, %v572
    %575 = vrot.lane.b32.xlu0 %v339, 104
    %v576 = vpop.permute.xlu0 %575
    %578 = vst.msk [vmem:[#allocation2 + $0x2] sm:$0x2] %vm565, %v576
    %579 = vst.msk [vmem:[#allocation2 + $0x3] sm:$0x2] %vm565, %v431
    %580 = vrot.lane.b32.xlu0 %v339, 88
    %v581 = vpop.permute.xlu0 %580
    %583 = vst.msk [vmem:[#allocation2 + $0x4] sm:$0x2] %vm565, %v581
    %584 = vrot.lane.b32.xlu0 %v339, 80
    %v585 = vpop.permute.xlu0 %584
    %587 = vst.msk [vmem:[#allocation2 + $0x5] sm:$0x2] %vm565, %v585
    %588 = vrot.lane.b32.xlu0 %v339, 72
    %v589 = vpop.permute.xlu0 %588
    %591 = vst.msk [vmem:[#allocation2 + $0x6] sm:$0x2] %vm565, %v589
    %592 = vst.msk [vmem:[#allocation2 + $0x7] sm:$0x2] %vm565, %v435
    %593 = vrot.lane.b32.xlu0 %v339, 56
    %v594 = vpop.permute.xlu0 %593
    %596 = vst.msk [vmem:[#allocation2 + $0x8] sm:$0x2] %vm565, %v594
    %597 = vrot.lane.b32.xlu0 %v339, 48
    %v598 = vpop.permute.xlu0 %597
    %600 = vst.msk [vmem:[#allocation2 + $0x9] sm:$0x2] %vm565, %v598
    %601 = vrot.lane.b32.xlu0 %v339, 40
    %v602 = vpop.permute.xlu0 %601
    %604 = vst.msk [vmem:[#allocation2 + $0xa] sm:$0x2] %vm565, %v602
    %605 = vst.msk [vmem:[#allocation2 + $0xb] sm:$0x2] %vm565, %v439
    %606 = vrot.lane.b32.xlu0 %v339, 24
    %v607 = vpop.permute.xlu0 %606
    %609 = vst.msk [vmem:[#allocation2 + $0xc] sm:$0x2] %vm565, %v607
    %610 = vrot.lane.b32.xlu0 %v339, 16
    %v611 = vpop.permute.xlu0 %610
    %613 = vst.msk [vmem:[#allocation2 + $0xd] sm:$0x2] %vm565, %v611
    %614 = vrot.lane.b32.xlu0 %v339, 8
    %v615 = vpop.permute.xlu0 %614
    %617 = vst.msk [vmem:[#allocation2 + $0xe] sm:$0x2] %vm565, %v615
    %618 = vst.msk [vmem:[#allocation2 + $0xf] sm:$0x2] %vm565, %v341
    %619 = vrot.lane.b32.xlu0 %v341, 120
    %v620 = vpop.permute.xlu0 %619
    %622 = vst.msk [vmem:[#allocation2 + $0x10] sm:$0x2] %vm565, %v620
    %623 = vrot.lane.b32.xlu0 %v341, 112
    %v624 = vpop.permute.xlu0 %623
    %626 = vst.msk [vmem:[#allocation2 + $0x11] sm:$0x2] %vm565, %v624
    %627 = vrot.lane.b32.xlu0 %v341, 104
    %v628 = vpop.permute.xlu0 %627
    %630 = vst.msk [vmem:[#allocation2 + $0x12] sm:$0x2] %vm565, %v628
    %631 = vst.msk [vmem:[#allocation2 + $0x13] sm:$0x2] %vm565, %v445
    %632 = vrot.lane.b32.xlu0 %v341, 88
    %v633 = vpop.permute.xlu0 %632
    %635 = vst.msk [vmem:[#allocation2 + $0x14] sm:$0x2] %vm565, %v633
    %636 = vrot.lane.b32.xlu0 %v341, 80
    %v637 = vpop.permute.xlu0 %636
    %639 = vst.msk [vmem:[#allocation2 + $0x15] sm:$0x2] %vm565, %v637
    %640 = vrot.lane.b32.xlu0 %v341, 72
    %v641 = vpop.permute.xlu0 %640
    %643 = vst.msk [vmem:[#allocation2 + $0x16] sm:$0x2] %vm565, %v641
    %644 = vst.msk [vmem:[#allocation2 + $0x17] sm:$0x2] %vm565, %v449
    %645 = vrot.lane.b32.xlu0 %v341, 56
    %v646 = vpop.permute.xlu0 %645
    %648 = vst.msk [vmem:[#allocation2 + $0x18] sm:$0x2] %vm565, %v646
    %649 = vrot.lane.b32.xlu0 %v341, 48
    %v650 = vpop.permute.xlu0 %649
    %652 = vst.msk [vmem:[#allocation2 + $0x19] sm:$0x2] %vm565, %v650
    %653 = vrot.lane.b32.xlu0 %v341, 40
    %v654 = vpop.permute.xlu0 %653
    %656 = vst.msk [vmem:[#allocation2 + $0x1a] sm:$0x2] %vm565, %v654
    %657 = vst.msk [vmem:[#allocation2 + $0x1b] sm:$0x2] %vm565, %v453
    %658 = vrot.lane.b32.xlu0 %v341, 24
    %v659 = vpop.permute.xlu0 %658
    %661 = vst.msk [vmem:[#allocation2 + $0x1c] sm:$0x2] %vm565, %v659
    %662 = vrot.lane.b32.xlu0 %v341, 16
    %v663 = vpop.permute.xlu0 %662
    %665 = vst.msk [vmem:[#allocation2 + $0x1d] sm:$0x2] %vm565, %v663
    %666 = vrot.lane.b32.xlu0 %v341, 8
    %v667 = vpop.permute.xlu0 %666
    %669 = vst.msk [vmem:[#allocation2 + $0x1e] sm:$0x2] %vm565, %v667
    %v670 = vld [vmem:[#allocation2] sm:$0xff]
    %v671 = vld [vmem:[#allocation2 + $0x8] sm:$0xff]
    %v672 = vld [vmem:[#allocation2 + $0x10] sm:$0xff]
    %v673 = vld [vmem:[#allocation2 + $0x18] sm:$0xff]
    %v674 = vlaneseq
    %v675 = vshrl.u32 %v674, 7
    %v676 = vsub.s32 1, %v675
    %v677 = vrot.slane %v380, %v676
    %vm678 = vcmask 261120
    %v680 = vsel %vm678, %v564, 0
    %682 = vmatprep.subr.mxu0 0.0
    %683 = vmatpush1.msra.mxu0 %v670
    %684 = vmatprep.subr.mxu0 0.0
    %685 = vmatpush1.msra.mxu0 %v671
    %686 = vmatprep.subr.mxu0 0.0
    %687 = vmatpush1.msra.mxu0 %v672
    %688 = vmatprep.subr.mxu0 0.0
    %689 = vmatpush1.msra.mxu0 %v673
    %690 = vmatprep.subr.mxu0 0.0
    %691 = vmatpush1.msra.mxu0 0.0
    %692 = vmatprep.subr.mxu0 0.0
    %693 = vmatpush1.msra.mxu0 0.0
    %694 = vmatprep.subr.mxu0 0.0
    %695 = vmatpush1.msra.mxu0 0.0
    %696 = vmatprep.subr.mxu0 0.0
    %697 = vmatpush1.msra.mxu0 0.0
    %698 = vmatprep.subr.mxu0 0.0
    %699 = vmatpush1.msra.mxu0 0.0
    %700 = vmatprep.subr.mxu0 0.0
    %701 = vmatpush1.msra.mxu0 0.0
    %702 = vmatprep.subr.mxu0 0.0
    %703 = vmatpush1.msra.mxu0 0.0
    %704 = vmatprep.subr.mxu0 0.0
    %705 = vmatpush1.msra.mxu0 0.0
    %706 = vmatprep.subr.mxu0 0.0
    %707 = vmatpush1.msra.mxu0 0.0
    %708 = vmatprep.subr.mxu0 0.0
    %709 = vmatpush1.msra.mxu0 0.0
    %710 = vmatprep.subr.mxu0 0.0
    %711 = vmatpush1.msra.mxu0 0.0
    %712 = vmatprep.subr.mxu0 0.0
    %713 = vmatpush1.msra.mxu0 0.0
    %714 = vmatprep.subr.mxu0 0.0
    %715 = vmatpush1.msra.mxu0 0.0
    %716 = vmatprep.subr.mxu0 0.0
    %717 = vmatpush1.msra.mxu0 0.0
    %718 = vmatprep.subr.mxu0 0.0
    %719 = vmatpush1.msra.mxu0 0.0
    %720 = vmatprep.subr.mxu0 0.0
    %721 = vmatpush1.msra.mxu0 0.0
    %722 = vmatprep.subr.mxu0 0.0
    %723 = vmatpush1.msra.mxu0 0.0
    %724 = vmatprep.subr.mxu0 0.0
    %725 = vmatpush1.msra.mxu0 0.0
    %726 = vmatprep.subr.mxu0 0.0
    %727 = vmatpush1.msra.mxu0 0.0
    %728 = vmatprep.subr.mxu0 0.0
    %729 = vmatpush1.msra.mxu0 0.0
    %730 = vmatprep.subr.mxu0 0.0
    %731 = vmatpush1.msra.mxu0 0.0
    %732 = vmatprep.subr.mxu0 0.0
    %733 = vmatpush1.msra.mxu0 0.0
    %734 = vmatprep.subr.mxu0 0.0
    %735 = vmatpush1.msra.mxu0 0.0
    %736 = vmatprep.subr.mxu0 0.0
    %737 = vmatpush1.msra.mxu0 0.0
    %738 = vmatprep.subr.mxu0 0.0
    %739 = vmatpush1.msra.mxu0 0.0
    %740 = vmatprep.subr.mxu0 0.0
    %741 = vmatpush1.msra.mxu0 0.0
    %742 = vmatprep.subr.mxu0 0.0
    %743 = vmatpush1.msra.mxu0 0.0
    %744 = vmatprep.subr.mxu0 0.0
    %745 = vmatpush1.msra.mxu0 0.0
    %746 = vmatprep.mubr.f32.mxu0 0.0
    %747 = vmatmul.mubr.f32.gmra.mrb[0].mxu0 %v680
    %v748 = vpop.f32.mrb[0].mxu0
    %v749 = vadd.f32 %v677, %v748
    %v750 = vpop.f32.mrb[0].mxu0
    %751 = vdwg.mxu0
    %vm752 = vcmask 58368
    %753 = vst.msk [vmem:[#allocation9] sm:$0x3] %vm752, %v749
    // Predicated region
    $region34: #{tpu_custom_call.1} parent=1 // pred_check
      _
    $region35: #{tpu_custom_call.1} parent=1 // pred_check_branch
      %755 = sbr.rel (0) target = $region37
    $region36: #{tpu_custom_call.1} parent=1 // pred_region
      %s757 = ssub.s32 32, 32
      %758 = vsyncadd [#allocation5], %s757
      %s760 = sshll.u32 [#allocation9], 4
      %s761 = int_to_ptr.vmem [resolvable:$true] %s760
      %763 = dma.vmem_to_hbm [thread:$0]  %s761, 32, %s5, [#allocation5]
    $region37: #{tpu_custom_call.1} parent=1 // pred_fallthru
      _
    // Predicated region
    $region38: #{tpu_custom_call.1} parent=1 // pred_check
      _
    $region39: #{tpu_custom_call.1} parent=1 // pred_check_branch
      %765 = sbr.rel (0) target = $region41
    $region40: #{tpu_custom_call.1} parent=1 // pred_region
      %766 = dma.done [#allocation5], 32
    $region41: #{tpu_custom_call.1} parent=1 // pred_fallthru
      _
    %767 = vsyncpa [#allocation4], 1
    %768 = vsyncpa [#allocation7], 1
    %769 = vsyncpa [#allocation5], 1

</llo_original>
